<compile_context>
chip_gen: v7x
topology: tpu7x:2x2x1
jax: 0.10.0
libtpu: 0.0.40
codegen_flags: <defaults>
</compile_context>

<pallas_src>
import jax
import jax.numpy as jnp
from jax import lax
from jax.experimental import pallas as pl
from jax.experimental.pallas import tpu as pltpu


def _t2v_kernel(x_ref, t_ref, wrow_ref, b_ref, mask_ref, o_ref):
    # x_ref:    [TR, Dp] (model dtype)  packed activations
    # t_ref:    [TR, K]  f32            one time value per packed lane-group
    # wrow_ref: [K, Dp]  f32            row j = w_full in lanes [j*D,(j+1)*D), 0 elsewhere
    # b_ref:    [1, Dp]  f32            b_full tiled K times
    # mask_ref: [1, Dp]  f32            1.0 at original column 0 of each lane-group
    if wrow_ref.shape[0] == 1:
        # K == 1: a size-1 contraction gains nothing on the MXU; plain broadcast FMA.
        lin = t_ref[...] * wrow_ref[...] + b_ref[...]
    else:
        # Offload the per-lane-group broadcast of t to the (otherwise idle) MXU.
        # precision=HIGHEST keeps f32 numerics (default precision truncates to bf16).
        lin = lax.dot_general(
            t_ref[...], wrow_ref[...],
            dimension_numbers=(((1,), (0,)), ((), ())),
            preferred_element_type=jnp.float32,
            precision=lax.Precision.HIGHEST,
        ) + b_ref[...]
    enc = jnp.where(mask_ref[...] > 0.5, lin, jnp.sin(lin))
    o_ref[...] = (x_ref[...].astype(jnp.float32) + enc).astype(o_ref.dtype)


def _tensorcore_count() -> int:
    """Best-effort TensorCores-per-chip (2 on v7x). Safe fallback: 1."""
    try:
        info = pltpu.get_tpu_info()
        for name in ("num_cores", "core_count", "num_tensorcores", "tensorcore_count"):
            v = getattr(info, name, None)
            if v is not None:
                v = int(v)
                if v > 0:
                    return v
    except Exception:
        pass
    try:
        v = getattr(jax.devices()[0], "num_cores", None)
        if v is not None:
            v = int(v)
            if v > 0:
                return v
    except Exception:
        pass
    return 1


def time2vec_forward(x, time_intervals, w0, b0, w, b):
    """x: [S, B, D]; time_intervals: [S, B]; params match the torch module shapes.

    Eval-mode forward only (dropout == identity)."""
    S, B, D = x.shape
    out_dtype = x.dtype
    R = S * B

    # ---- lane-dense packing factor (fold K rows per 128-lane row when D < 128) ----
    K = 128 // D if (D < 128 and 128 % D == 0) else 1
    Dp = K * D

    # ---- fused / packed parameters (tiny, resident in VMEM) -----------------------
    w_full = jnp.concatenate(
        [jnp.reshape(w0, (1, 1)), jnp.reshape(w, (1, D - 1))], axis=1
    ).astype(jnp.float32)                                               # [1, D]
    b_full = jnp.concatenate(
        [jnp.reshape(b0, (1, 1)), jnp.reshape(b, (1, D - 1))], axis=1
    ).astype(jnp.float32)                                               # [1, D]
    b_packed = jnp.tile(b_full, (1, K))                                 # [1, Dp]
    # Block-diagonal weight rows: wrow[j, j2*D + d] = (j == j2) * w_full[d]
    wrow = (jnp.eye(K, dtype=jnp.float32)[:, :, None]
            * w_full[0][None, None, :]).reshape(K, Dp)                  # [K, Dp]
    # Column-0 selector (linear vs sin), precomputed once instead of per-tile iota.
    mask = (jnp.arange(Dp, dtype=jnp.int32) % D == 0
            ).astype(jnp.float32)[None, :]                              # [1, Dp]

    # ---- pack rows; pad ONLY if R is not a multiple of K (rare) --------------------
    x2 = x.reshape(R, D)
    t2 = time_intervals.reshape(R).astype(jnp.float32)
    rem = R % K
    if rem:
        x2 = jnp.pad(x2, ((0, K - rem), (0, 0)))
        t2 = jnp.pad(t2, (0, K - rem))
    Rp = pl.cdiv(R, K)                                  # packed rows (no tile padding)
    x_p = x2.reshape(Rp, Dp)                            # lane-dense slab [Rp, K*D]
    t_p = t2.reshape(Rp, K)                             # one t value per lane-group

    # ---- row-tile selection on packed rows, VMEM-budgeted --------------------------
    x_bytes = jnp.dtype(x.dtype).itemsize
    o_bytes = jnp.dtype(out_dtype).itemsize
    # Native sublane tile for the output dtype (8 f32, 16 bf16, 32 int8/fp8).
    sub = 8 if o_bytes >= 4 else (16 if o_bytes == 2 else 32)
    # t block [TR, K] f32 is lane-padded to 128 lanes in VMEM -> 512 B per packed row.
    bytes_per_prow = Dp * (x_bytes + o_bytes) + 512
    # ~12 MiB per buffer set -> ~24 MiB double-buffered; fits every generation once
    # vmem_limit_bytes is raised (v7x has 64 MiB/TC, v5e/v6e have 128 MiB).
    TR = (12 * 1024 * 1024 // bytes_per_prow) // sub * sub
    TR = int(max(sub, TR))
    if Rp <= TR:
        if _tensorcore_count() >= 2 and Rp >= 2 * sub:
            # >= 2 roughly-equal grid steps so the "parallel" axis shards across both
            # TensorCores on v7x; skipped on single-TC parts (v5e/v6e).
            TR = (pl.cdiv(Rp, 2) + sub - 1) // sub * sub
        else:
            TR = Rp                                     # single full-extent block
    grid_n = pl.cdiv(Rp, TR)                            # partial last block is fine

    out = pl.pallas_call(
        _t2v_kernel,
        out_shape=jax.ShapeDtypeStruct((Rp, Dp), out_dtype),
        grid_spec=pltpu.PrefetchScalarGridSpec(
            num_scalar_prefetch=0,
            grid=(grid_n,),
            in_specs=[
                pl.BlockSpec((TR, Dp), lambda i: (i, 0)),   # packed x rows
                pl.BlockSpec((TR, K), lambda i: (i, 0)),    # packed time values
                pl.BlockSpec((K, Dp), lambda i: (0, 0)),    # block-diag weights (resident)
                pl.BlockSpec((1, Dp), lambda i: (0, 0)),    # packed biases (resident)
                pl.BlockSpec((1, Dp), lambda i: (0, 0)),    # column-0 selector (resident)
            ],
            out_specs=pl.BlockSpec((TR, Dp), lambda i: (i, 0)),
        ),
        compiler_params=pltpu.CompilerParams(
            dimension_semantics=("parallel",),
            vmem_limit_bytes=48 * 1024 * 1024,
        ),
    )(x_p, t_p, wrow, b_packed, mask)

    if rem:
        return out.reshape(Rp * K, D)[:R].reshape(S, B, D)
    return out.reshape(S, B, D)


def reference_forward(x, time_intervals, w0, b0, w, b):
    t = time_intervals.astype(jnp.float32)
    v0 = (t * w0 + b0)[..., None]                              # [S, B, 1]
    vr = jnp.sin(t[..., None] * w + b)                         # [S, B, D-1]
    enc = jnp.concatenate([v0, vr], axis=-1)
    return x + enc


if __name__ == "__main__":
    S, B, D = 8, 2, 32  # seq_len, batch, d_model

    key = jax.random.PRNGKey(0)
    k_x, k_t, k_w0, k_b0, k_w, k_b = jax.random.split(key, 6)

    x = jax.random.normal(k_x, (S, B, D), dtype=jnp.float32)
    time_intervals = jax.random.uniform(k_t, (S, B), dtype=jnp.float32) * 10.0

    # Deterministic parameter init matching nn.Parameter(torch.randn(...)) shapes.
    w0 = jax.random.normal(k_w0, (1,), dtype=jnp.float32)
    b0 = jax.random.normal(k_b0, (1,), dtype=jnp.float32)
    w = jax.random.normal(k_w, (1, D - 1), dtype=jnp.float32)
    b = jax.random.normal(k_b, (D - 1,), dtype=jnp.float32)

    out = time2vec_forward(x, time_intervals, w0, b0, w, b)
    out = jax.block_until_ready(out)

    ref = reference_forward(x, time_intervals, w0, b0, w, b)
    assert out.shape == (S, B, D)
    assert jnp.allclose(out, ref, atol=1e-5, rtol=1e-5), "mismatch vs reference"

    print("KERNEL_OK")
</pallas_src>

<mosaic_0001>
module attributes {stable_mosaic.version = 11 : i64} {
  func.func @_t2v_kernel(%arg0: i32, %arg1: memref<4x128xf32, #tpu.memory_space<vmem>>, %arg2: memref<4x4xf32, #tpu.memory_space<vmem>>, %arg3: memref<4x128xf32, #tpu.memory_space<vmem>>, %arg4: memref<1x128xf32, #tpu.memory_space<vmem>>, %arg5: memref<1x128xf32, #tpu.memory_space<vmem>>, %arg6: memref<4x128xf32, #tpu.memory_space<vmem>>) attributes {dimension_semantics = [#tpu.dimension_semantics<parallel>], iteration_bounds = array<i64: 1>, scalar_prefetch = 0 : i64, scratch_operands = 0 : i64, tpu.core_type = #tpu.core_type<tc>, window_params = [{transform_indices = @transform_0, window_bounds = array<i64: 4, 128>}, {transform_indices = @transform_1, window_bounds = array<i64: 4, 4>}, {pipeline_mode = #tpu.pipeline_mode<synchronous>, transform_indices = @transform_2, window_bounds = array<i64: 4, 128>}, {pipeline_mode = #tpu.pipeline_mode<synchronous>, transform_indices = @transform_3, window_bounds = array<i64: 1, 128>}, {pipeline_mode = #tpu.pipeline_mode<synchronous>, transform_indices = @transform_4, window_bounds = array<i64: 1, 128>}, {transform_indices = @transform_5, window_bounds = array<i64: 4, 128>}]} {
    %c0 = arith.constant 0 : index
    %c0_0 = arith.constant 0 : index
    %0 = vector.load %arg2[%c0, %c0_0] : memref<4x4xf32, #tpu.memory_space<vmem>>, vector<4x4xf32>
    %c0_1 = arith.constant 0 : index
    %c0_2 = arith.constant 0 : index
    %1 = vector.load %arg3[%c0_1, %c0_2] : memref<4x128xf32, #tpu.memory_space<vmem>>, vector<4x128xf32>
    %cst = arith.constant dense<0.000000e+00> : vector<4x128xf32>
    %2 = tpu.matmul %0, %1, %cst {dimension_numbers = #tpu.dot_dimension_numbers<[1], [0], [0], [1], [0, 0, 1, 1], [], []>, precision = #tpu.contract_precision<fp32>} : vector<4x4xf32>, vector<4x128xf32>, vector<4x128xf32> -> vector<4x128xf32>
    %c0_3 = arith.constant 0 : index
    %c0_4 = arith.constant 0 : index
    %3 = vector.load %arg4[%c0_3, %c0_4] : memref<1x128xf32, #tpu.memory_space<vmem>>, vector<1x128xf32>
    %4 = vector.broadcast %3 : vector<1x128xf32> to vector<4x128xf32>
    %5 = arith.addf %2, %4 : vector<4x128xf32>
    %c0_5 = arith.constant 0 : index
    %c0_6 = arith.constant 0 : index
    %6 = vector.load %arg5[%c0_5, %c0_6] : memref<1x128xf32, #tpu.memory_space<vmem>>, vector<1x128xf32>
    %cst_7 = arith.constant 5.000000e-01 : f32
    %7 = vector.broadcast %cst_7 : f32 to vector<1x128xf32>
    %8 = arith.cmpf ogt, %6, %7 : vector<1x128xf32>
    %9 = math.sin %5 : vector<4x128xf32>
    %10 = vector.shape_cast %8 : vector<1x128xi1> to vector<1x128xi1>
    %11 = vector.broadcast %10 : vector<1x128xi1> to vector<4x128xi1>
    %12 = arith.select %11, %5, %9 : vector<4x128xi1>, vector<4x128xf32>
    %c0_8 = arith.constant 0 : index
    %c0_9 = arith.constant 0 : index
    %13 = vector.load %arg1[%c0_8, %c0_9] : memref<4x128xf32, #tpu.memory_space<vmem>>, vector<4x128xf32>
    %14 = arith.addf %13, %12 : vector<4x128xf32>
    %c0_10 = arith.constant 0 : index
    %c0_11 = arith.constant 0 : index
    %15 = vector.load %arg6[%c0_10, %c0_11] : memref<4x128xf32, #tpu.memory_space<vmem>>, vector<4x128xf32>
    tpu.vector_store %arg6[%c0_10, %c0_11], %14 {strides = array<i32>} : memref<4x128xf32, #tpu.memory_space<vmem>>, vector<4x128xf32>,
    return
  }
  func.func @transform_0(%arg0: i32) -> (i32, i32) {
    %c0_i32 = arith.constant 0 : i32
    %c0_i32_0 = arith.constant 0 : i32
    return %arg0, %c0_i32 : i32, i32
  }
  func.func @transform_1(%arg0: i32) -> (i32, i32) {
    %c0_i32 = arith.constant 0 : i32
    %c0_i32_0 = arith.constant 0 : i32
    return %arg0, %c0_i32 : i32, i32
  }
  func.func @transform_2(%arg0: i32) -> (i32, i32) {
    %c0_i32 = arith.constant 0 : i32
    %c0_i32_0 = arith.constant 0 : i32
    %c0_i32_1 = arith.constant 0 : i32
    return %c0_i32, %c0_i32_0 : i32, i32
  }
  func.func @transform_3(%arg0: i32) -> (i32, i32) {
    %c0_i32 = arith.constant 0 : i32
    %c0_i32_0 = arith.constant 0 : i32
    %c0_i32_1 = arith.constant 0 : i32
    return %c0_i32, %c0_i32_0 : i32, i32
  }
  func.func @transform_4(%arg0: i32) -> (i32, i32) {
    %c0_i32 = arith.constant 0 : i32
    %c0_i32_0 = arith.constant 0 : i32
    %c0_i32_1 = arith.constant 0 : i32
    return %c0_i32, %c0_i32_0 : i32, i32
  }
  func.func @transform_5(%arg0: i32) -> (i32, i32) {
    %c0_i32 = arith.constant 0 : i32
    %c0_i32_0 = arith.constant 0 : i32
    return %arg0, %c0_i32 : i32, i32
  }
}

</mosaic_0001>

<llo_original>
// kernel: tpu_custom_call.1
$region0: #{tpu_custom_call.1}
  #allocation0 [shape = 'u32[]', space=smem, size = 0x4, offset = 0x4, fixed_abs, tag = 'smem constant byte address 0x4 - core index']
  #allocation1 [shape = 'u32[144,128]{1,0:T(1,128)}', space=vmem, size = 0x12000, scoped, tag = 'internal scratch']
  %s0 = inlined_call_operand.hbm [shape: f32[4,128], index: 0, kind: input, shape index: {}]
  %s1 = inlined_call_operand.hbm [shape: f32[4,4], index: 1, kind: input, shape index: {}]
  %s2 = inlined_call_operand.vmem [shape: f32[4,128], index: 2, kind: input, shape index: {}]
  %s3 = inlined_call_operand.vmem [shape: f32[1,128], index: 3, kind: input, shape index: {}]
  %s4 = inlined_call_operand.vmem [shape: f32[1,128], index: 4, kind: input, shape index: {}]
  %s5 = inlined_call_operand.hbm [shape: f32[4,128], index: 5, kind: output, shape index: {}]
  %s6 = sld [smem:[#allocation0]]
  $region38: #{tpu_custom_call.1} parent=0
    _
  %s8 = ssub.s32 1, %s6
  %s9 = scalar_select 0, %s8, %s6
  $region1: #{tpu_custom_call.1} parent=0
    #allocation2 [shape = 'u8[2048]{0}', space=vmem, size = 0x800, scoped, tag = 'input window, operand 0, single buffered']
    #allocation3 [shape = 's32[1]{0}', space=sflag, size = 0x4, scoped, tag = 'scoped memory for tpu_custom_call.1']
    #allocation4 [shape = 's32[1]{0}', space=sflag, size = 0x4, scoped, tag = 'scoped memory for tpu_custom_call.1']
    #allocation5 [shape = 'u8[2048]{0}', space=vmem, size = 0x800, scoped, tag = 'input window, operand 1, single buffered']
    #allocation6 [shape = 's32[1]{0}', space=sflag, size = 0x4, scoped, tag = 'scoped memory for tpu_custom_call.1']
    #allocation7 [shape = 'u8[2048]{0}', space=vmem, size = 0x800, scoped, tag = 'output window, operand 0, single buffered']
    %10 = vsyncpa [#allocation3], 0
    %11 = vsyncpa [#allocation6], 0
    %12 = vsyncpa [#allocation4], 0
    // Predicated region
    $region2: #{tpu_custom_call.1} parent=1 // pred_check
      _
    $region3: #{tpu_custom_call.1} parent=1 // pred_check_branch
      %14 = sbr.rel (0) target = $region5
    $region4: #{tpu_custom_call.1} parent=1 // pred_region
      %s16 = ssub.s32 64, 64
      %17 = vsyncadd [#allocation3], %s16
      %s19 = sshll.u32 [#allocation2], 4
      %s20 = int_to_ptr.vmem [resolvable:$true] %s19
      %22 = dma.hbm_to_vmem [thread:$0]  %s0, 64, %s20, [#allocation3]
    $region5: #{tpu_custom_call.1} parent=1 // pred_fallthru
      _
    // Predicated region
    $region6: #{tpu_custom_call.1} parent=1 // pred_check
      _
    $region7: #{tpu_custom_call.1} parent=1 // pred_check_branch
      %24 = sbr.rel (0) target = $region9
    $region8: #{tpu_custom_call.1} parent=1 // pred_region
      %s26 = ssub.s32 64, 64
      %27 = vsyncadd [#allocation6], %s26
      %s29 = sshll.u32 [#allocation5], 4
      %s30 = int_to_ptr.vmem [resolvable:$true] %s29
      %32 = dma.hbm_to_vmem [thread:$0]  %s1, 64, %s30, [#allocation6]
    $region9: #{tpu_custom_call.1} parent=1 // pred_fallthru
      _
    // Predicated region
    $region10: #{tpu_custom_call.1} parent=1 // pred_check
      _
    $region11: #{tpu_custom_call.1} parent=1 // pred_check_branch
      %34 = sbr.rel (0) target = $region13
    $region12: #{tpu_custom_call.1} parent=1 // pred_region
      _
    $region13: #{tpu_custom_call.1} parent=1 // pred_fallthru
      _
    // Predicated region
    $region14: #{tpu_custom_call.1} parent=1 // pred_check
      _
    $region15: #{tpu_custom_call.1} parent=1 // pred_check_branch
      %36 = sbr.rel (0) target = $region17
    $region16: #{tpu_custom_call.1} parent=1 // pred_region
      _
    $region17: #{tpu_custom_call.1} parent=1 // pred_fallthru
      _
    // Predicated region
    $region18: #{tpu_custom_call.1} parent=1 // pred_check
      _
    $region19: #{tpu_custom_call.1} parent=1 // pred_check_branch
      %38 = sbr.rel (0) target = $region21
    $region20: #{tpu_custom_call.1} parent=1 // pred_region
      _
    $region21: #{tpu_custom_call.1} parent=1 // pred_fallthru
      _
    // Predicated region
    $region22: #{tpu_custom_call.1} parent=1 // pred_check
      _
    $region23: #{tpu_custom_call.1} parent=1 // pred_check_branch
      %40 = sbr.rel (0) target = $region25
    $region24: #{tpu_custom_call.1} parent=1 // pred_region
      %41 = dma.done [#allocation3], 64
    $region25: #{tpu_custom_call.1} parent=1 // pred_fallthru
      _
    // Predicated region
    $region26: #{tpu_custom_call.1} parent=1 // pred_check
      _
    $region27: #{tpu_custom_call.1} parent=1 // pred_check_branch
      %43 = sbr.rel (0) target = $region29
    $region28: #{tpu_custom_call.1} parent=1 // pred_region
      %44 = dma.done [#allocation6], 64
    $region29: #{tpu_custom_call.1} parent=1 // pred_fallthru
      _
    %v45 = vld [vmem:[#allocation5] sm:$0xf]
    %v46 = vld [vmem:[%s2] sm:$0xf]
    %v47 = vld [vmem:[%s3] sm:$0x1]
    %v49 = vlaneseq
    %v50 = vshrl.u32 %v49, 7
    %v51 = vsub.s32 0, %v50
    %v52 = vrot.slane %v47, %v51
    %vm54 = vcmask 31744
    %v56 = vsel %vm54, %v45, 0
    %vm58 = vcmask 1043456
    %v60 = vsel %vm58, %v46, 0
    %62 = vmatprep.subr.mxu0 0.0
    %v63 = vand.u32 %v60, 4294901760
    %64 = vmatpush1.msra.mxu0 %v63
    %65 = vmatprep.subr.mxu0 0.0
    %66 = vmatpush1.msra.mxu0 0.0
    %67 = vmatprep.subr.mxu0 0.0
    %68 = vmatpush1.msra.mxu0 0.0
    %69 = vmatprep.subr.mxu0 0.0
    %70 = vmatpush1.msra.mxu0 0.0
    %71 = vmatprep.subr.mxu0 0.0
    %72 = vmatpush1.msra.mxu0 0.0
    %73 = vmatprep.subr.mxu0 0.0
    %74 = vmatpush1.msra.mxu0 0.0
    %75 = vmatprep.subr.mxu0 0.0
    %76 = vmatpush1.msra.mxu0 0.0
    %77 = vmatprep.subr.mxu0 0.0
    %78 = vmatpush1.msra.mxu0 0.0
    %79 = vmatprep.subr.mxu0 0.0
    %80 = vmatpush1.msra.mxu0 0.0
    %81 = vmatprep.subr.mxu0 0.0
    %82 = vmatpush1.msra.mxu0 0.0
    %83 = vmatprep.subr.mxu0 0.0
    %84 = vmatpush1.msra.mxu0 0.0
    %85 = vmatprep.subr.mxu0 0.0
    %86 = vmatpush1.msra.mxu0 0.0
    %87 = vmatprep.subr.mxu0 0.0
    %88 = vmatpush1.msra.mxu0 0.0
    %89 = vmatprep.subr.mxu0 0.0
    %90 = vmatpush1.msra.mxu0 0.0
    %91 = vmatprep.subr.mxu0 0.0
    %92 = vmatpush1.msra.mxu0 0.0
    %93 = vmatprep.subr.mxu0 0.0
    %94 = vmatpush1.msra.mxu0 0.0
    %95 = vmatprep.subr.mxu0 0.0
    %96 = vmatpush1.msra.mxu0 0.0
    %97 = vmatprep.subr.mxu0 0.0
    %98 = vmatpush1.msra.mxu0 0.0
    %99 = vmatprep.subr.mxu0 0.0
    %100 = vmatpush1.msra.mxu0 0.0
    %101 = vmatprep.subr.mxu0 0.0
    %102 = vmatpush1.msra.mxu0 0.0
    %103 = vmatprep.subr.mxu0 0.0
    %104 = vmatpush1.msra.mxu0 0.0
    %105 = vmatprep.subr.mxu0 0.0
    %106 = vmatpush1.msra.mxu0 0.0
    %107 = vmatprep.subr.mxu0 0.0
    %108 = vmatpush1.msra.mxu0 0.0
    %109 = vmatprep.subr.mxu0 0.0
    %110 = vmatpush1.msra.mxu0 0.0
    %111 = vmatprep.subr.mxu0 0.0
    %112 = vmatpush1.msra.mxu0 0.0
    %113 = vmatprep.subr.mxu0 0.0
    %114 = vmatpush1.msra.mxu0 0.0
    %115 = vmatprep.subr.mxu0 0.0
    %116 = vmatpush1.msra.mxu0 0.0
    %117 = vmatprep.subr.mxu0 0.0
    %118 = vmatpush1.msra.mxu0 0.0
    %119 = vmatprep.subr.mxu0 0.0
    %120 = vmatpush1.msra.mxu0 0.0
    %121 = vmatprep.subr.mxu0 0.0
    %122 = vmatpush1.msra.mxu0 0.0
    %123 = vmatprep.subr.mxu0 0.0
    %124 = vmatpush1.msra.mxu0 0.0
    %125 = vmatprep.subr.mxu0 0.0
    %126 = vmatpush1.msra.mxu0 0.0
    %127 = vmatprep.mubr.f32.mxu0 0.0
    %v128 = vand.u32 %v56, 4294901760
    %v129 = vsub.f32 %v56, %v128
    %v130 = vand.u32 %v129, 4294901760
    %v131 = vsub.f32 %v129, %v130
    %v132 = vand.u32 %v131, 4294901760
    %133 = vmatmul.mubr.f32.gmra.mrb[0].mxu0 %v132
    %v134 = vpop.f32.mrb[0].mxu0
    %v135 = vadd.f32 %v52, %v134
    %v136 = vpop.f32.mrb[0].mxu0
    %137 = vdwg.mxu0
    %138 = vmatprep.subr.mxu0 0.0
    %v139 = vand.u32 %v60, 4294901760
    %v140 = vsub.f32 %v60, %v139
    %v141 = vand.u32 %v140, 4294901760
    %v142 = vsub.f32 %v140, %v141
    %v143 = vand.u32 %v142, 4294901760
    %144 = vmatpush1.msra.mxu0 %v143
    %145 = vmatprep.subr.mxu0 0.0
    %146 = vmatpush1.msra.mxu0 0.0
    %147 = vmatprep.subr.mxu0 0.0
    %148 = vmatpush1.msra.mxu0 0.0
    %149 = vmatprep.subr.mxu0 0.0
    %150 = vmatpush1.msra.mxu0 0.0
    %151 = vmatprep.subr.mxu0 0.0
    %152 = vmatpush1.msra.mxu0 0.0
    %153 = vmatprep.subr.mxu0 0.0
    %154 = vmatpush1.msra.mxu0 0.0
    %155 = vmatprep.subr.mxu0 0.0
    %156 = vmatpush1.msra.mxu0 0.0
    %157 = vmatprep.subr.mxu0 0.0
    %158 = vmatpush1.msra.mxu0 0.0
    %159 = vmatprep.subr.mxu0 0.0
    %160 = vmatpush1.msra.mxu0 0.0
    %161 = vmatprep.subr.mxu0 0.0
    %162 = vmatpush1.msra.mxu0 0.0
    %163 = vmatprep.subr.mxu0 0.0
    %164 = vmatpush1.msra.mxu0 0.0
    %165 = vmatprep.subr.mxu0 0.0
    %166 = vmatpush1.msra.mxu0 0.0
    %167 = vmatprep.subr.mxu0 0.0
    %168 = vmatpush1.msra.mxu0 0.0
    %169 = vmatprep.subr.mxu0 0.0
    %170 = vmatpush1.msra.mxu0 0.0
    %171 = vmatprep.subr.mxu0 0.0
    %172 = vmatpush1.msra.mxu0 0.0
    %173 = vmatprep.subr.mxu0 0.0
    %174 = vmatpush1.msra.mxu0 0.0
    %175 = vmatprep.subr.mxu0 0.0
    %176 = vmatpush1.msra.mxu0 0.0
    %177 = vmatprep.subr.mxu0 0.0
    %178 = vmatpush1.msra.mxu0 0.0
    %179 = vmatprep.subr.mxu0 0.0
    %180 = vmatpush1.msra.mxu0 0.0
    %181 = vmatprep.subr.mxu0 0.0
    %182 = vmatpush1.msra.mxu0 0.0
    %183 = vmatprep.subr.mxu0 0.0
    %184 = vmatpush1.msra.mxu0 0.0
    %185 = vmatprep.subr.mxu0 0.0
    %186 = vmatpush1.msra.mxu0 0.0
    %187 = vmatprep.subr.mxu0 0.0
    %188 = vmatpush1.msra.mxu0 0.0
    %189 = vmatprep.subr.mxu0 0.0
    %190 = vmatpush1.msra.mxu0 0.0
    %191 = vmatprep.subr.mxu0 0.0
    %192 = vmatpush1.msra.mxu0 0.0
    %193 = vmatprep.subr.mxu0 0.0
    %194 = vmatpush1.msra.mxu0 0.0
    %195 = vmatprep.subr.mxu0 0.0
    %196 = vmatpush1.msra.mxu0 0.0
    %197 = vmatprep.subr.mxu0 0.0
    %198 = vmatpush1.msra.mxu0 0.0
    %199 = vmatprep.subr.mxu0 0.0
    %200 = vmatpush1.msra.mxu0 0.0
    %201 = vmatprep.subr.mxu0 0.0
    %202 = vmatpush1.msra.mxu0 0.0
    %203 = vmatprep.subr.mxu0 0.0
    %204 = vmatpush1.msra.mxu0 0.0
    %205 = vmatprep.subr.mxu0 0.0
    %206 = vmatpush1.msra.mxu0 0.0
    %207 = vmatprep.mubr.f32.mxu0 0.0
    %v208 = vand.u32 %v56, 4294901760
    %209 = vmatmul.mubr.f32.gmra.mrb[0].mxu0 %v208
    %v210 = vpop.f32.mrb[0].mxu0
    %v211 = vadd.f32 %v135, %v210
    %v212 = vpop.f32.mrb[0].mxu0
    %213 = vdwg.mxu0
    %214 = vmatprep.subr.mxu0 0.0
    %v215 = vand.u32 %v60, 4294901760
    %v216 = vsub.f32 %v60, %v215
    %217 = vmatpush1.msra.mxu0 %v216
    %218 = vmatprep.subr.mxu0 0.0
    %219 = vmatpush1.msra.mxu0 0.0
    %220 = vmatprep.subr.mxu0 0.0
    %221 = vmatpush1.msra.mxu0 0.0
    %222 = vmatprep.subr.mxu0 0.0
    %223 = vmatpush1.msra.mxu0 0.0
    %224 = vmatprep.subr.mxu0 0.0
    %225 = vmatpush1.msra.mxu0 0.0
    %226 = vmatprep.subr.mxu0 0.0
    %227 = vmatpush1.msra.mxu0 0.0
    %228 = vmatprep.subr.mxu0 0.0
    %229 = vmatpush1.msra.mxu0 0.0
    %230 = vmatprep.subr.mxu0 0.0
    %231 = vmatpush1.msra.mxu0 0.0
    %232 = vmatprep.subr.mxu0 0.0
    %233 = vmatpush1.msra.mxu0 0.0
    %234 = vmatprep.subr.mxu0 0.0
    %235 = vmatpush1.msra.mxu0 0.0
    %236 = vmatprep.subr.mxu0 0.0
    %237 = vmatpush1.msra.mxu0 0.0
    %238 = vmatprep.subr.mxu0 0.0
    %239 = vmatpush1.msra.mxu0 0.0
    %240 = vmatprep.subr.mxu0 0.0
    %241 = vmatpush1.msra.mxu0 0.0
    %242 = vmatprep.subr.mxu0 0.0
    %243 = vmatpush1.msra.mxu0 0.0
    %244 = vmatprep.subr.mxu0 0.0
    %245 = vmatpush1.msra.mxu0 0.0
    %246 = vmatprep.subr.mxu0 0.0
    %247 = vmatpush1.msra.mxu0 0.0
    %248 = vmatprep.subr.mxu0 0.0
    %249 = vmatpush1.msra.mxu0 0.0
    %250 = vmatprep.subr.mxu0 0.0
    %251 = vmatpush1.msra.mxu0 0.0
    %252 = vmatprep.subr.mxu0 0.0
    %253 = vmatpush1.msra.mxu0 0.0
    %254 = vmatprep.subr.mxu0 0.0
    %255 = vmatpush1.msra.mxu0 0.0
    %256 = vmatprep.subr.mxu0 0.0
    %257 = vmatpush1.msra.mxu0 0.0
    %258 = vmatprep.subr.mxu0 0.0
    %259 = vmatpush1.msra.mxu0 0.0
    %260 = vmatprep.subr.mxu0 0.0
    %261 = vmatpush1.msra.mxu0 0.0
    %262 = vmatprep.subr.mxu0 0.0
    %263 = vmatpush1.msra.mxu0 0.0
    %264 = vmatprep.subr.mxu0 0.0
    %265 = vmatpush1.msra.mxu0 0.0
    %266 = vmatprep.subr.mxu0 0.0
    %267 = vmatpush1.msra.mxu0 0.0
    %268 = vmatprep.subr.mxu0 0.0
    %269 = vmatpush1.msra.mxu0 0.0
    %270 = vmatprep.subr.mxu0 0.0
    %271 = vmatpush1.msra.mxu0 0.0
    %272 = vmatprep.subr.mxu0 0.0
    %273 = vmatpush1.msra.mxu0 0.0
    %274 = vmatprep.subr.mxu0 0.0
    %275 = vmatpush1.msra.mxu0 0.0
    %276 = vmatprep.subr.mxu0 0.0
    %277 = vmatpush1.msra.mxu0 0.0
    %278 = vmatprep.subr.mxu0 0.0
    %279 = vmatpush1.msra.mxu0 0.0
    %280 = vmatprep.mubr.f32.mxu0 0.0
    %v281 = vand.u32 %v56, 4294901760
    %v282 = vsub.f32 %v56, %v281
    %283 = vmatmul.mubr.f32.gmra.mrb[0].mxu0 %v282
    %v284 = vpop.f32.mrb[0].mxu0
    %v285 = vadd.f32 %v211, %v284
    %v286 = vpop.f32.mrb[0].mxu0
    %287 = vdwg.mxu0
    %288 = vmatprep.subr.mxu0 0.0
    %v289 = vand.u32 %v60, 4294901760
    %290 = vmatpush1.msra.mxu0 %v289
    %291 = vmatprep.subr.mxu0 0.0
    %292 = vmatpush1.msra.mxu0 0.0
    %293 = vmatprep.subr.mxu0 0.0
    %294 = vmatpush1.msra.mxu0 0.0
    %295 = vmatprep.subr.mxu0 0.0
    %296 = vmatpush1.msra.mxu0 0.0
    %297 = vmatprep.subr.mxu0 0.0
    %298 = vmatpush1.msra.mxu0 0.0
    %299 = vmatprep.subr.mxu0 0.0
    %300 = vmatpush1.msra.mxu0 0.0
    %301 = vmatprep.subr.mxu0 0.0
    %302 = vmatpush1.msra.mxu0 0.0
    %303 = vmatprep.subr.mxu0 0.0
    %304 = vmatpush1.msra.mxu0 0.0
    %305 = vmatprep.subr.mxu0 0.0
    %306 = vmatpush1.msra.mxu0 0.0
    %307 = vmatprep.subr.mxu0 0.0
    %308 = vmatpush1.msra.mxu0 0.0
    %309 = vmatprep.subr.mxu0 0.0
    %310 = vmatpush1.msra.mxu0 0.0
    %311 = vmatprep.subr.mxu0 0.0
    %312 = vmatpush1.msra.mxu0 0.0
    %313 = vmatprep.subr.mxu0 0.0
    %314 = vmatpush1.msra.mxu0 0.0
    %315 = vmatprep.subr.mxu0 0.0
    %316 = vmatpush1.msra.mxu0 0.0
    %317 = vmatprep.subr.mxu0 0.0
    %318 = vmatpush1.msra.mxu0 0.0
    %319 = vmatprep.subr.mxu0 0.0
    %320 = vmatpush1.msra.mxu0 0.0
    %321 = vmatprep.subr.mxu0 0.0
    %322 = vmatpush1.msra.mxu0 0.0
    %323 = vmatprep.subr.mxu0 0.0
    %324 = vmatpush1.msra.mxu0 0.0
    %325 = vmatprep.subr.mxu0 0.0
    %326 = vmatpush1.msra.mxu0 0.0
    %327 = vmatprep.subr.mxu0 0.0
    %328 = vmatpush1.msra.mxu0 0.0
    %329 = vmatprep.subr.mxu0 0.0
    %330 = vmatpush1.msra.mxu0 0.0
    %331 = vmatprep.subr.mxu0 0.0
    %332 = vmatpush1.msra.mxu0 0.0
    %333 = vmatprep.subr.mxu0 0.0
    %334 = vmatpush1.msra.mxu0 0.0
    %335 = vmatprep.subr.mxu0 0.0
    %336 = vmatpush1.msra.mxu0 0.0
    %337 = vmatprep.subr.mxu0 0.0
    %338 = vmatpush1.msra.mxu0 0.0
    %339 = vmatprep.subr.mxu0 0.0
    %340 = vmatpush1.msra.mxu0 0.0
    %341 = vmatprep.subr.mxu0 0.0
    %342 = vmatpush1.msra.mxu0 0.0
    %343 = vmatprep.subr.mxu0 0.0
    %344 = vmatpush1.msra.mxu0 0.0
    %345 = vmatprep.subr.mxu0 0.0
    %346 = vmatpush1.msra.mxu0 0.0
    %347 = vmatprep.subr.mxu0 0.0
    %348 = vmatpush1.msra.mxu0 0.0
    %349 = vmatprep.subr.mxu0 0.0
    %350 = vmatpush1.msra.mxu0 0.0
    %351 = vmatprep.subr.mxu0 0.0
    %352 = vmatpush1.msra.mxu0 0.0
    %353 = vmatprep.mubr.f32.mxu0 0.0
    %v354 = vand.u32 %v56, 4294901760
    %v355 = vsub.f32 %v56, %v354
    %v356 = vand.u32 %v355, 4294901760
    %357 = vmatmul.mubr.f32.gmra.mrb[0].mxu0 %v356
    %v358 = vpop.f32.mrb[0].mxu0
    %v359 = vadd.f32 %v285, %v358
    %v360 = vpop.f32.mrb[0].mxu0
    %361 = vdwg.mxu0
    %362 = vmatprep.subr.mxu0 0.0
    %v363 = vand.u32 %v60, 4294901760
    %v364 = vsub.f32 %v60, %v363
    %v365 = vand.u32 %v364, 4294901760
    %366 = vmatpush1.msra.mxu0 %v365
    %367 = vmatprep.subr.mxu0 0.0
    %368 = vmatpush1.msra.mxu0 0.0
    %369 = vmatprep.subr.mxu0 0.0
    %370 = vmatpush1.msra.mxu0 0.0
    %371 = vmatprep.subr.mxu0 0.0
    %372 = vmatpush1.msra.mxu0 0.0
    %373 = vmatprep.subr.mxu0 0.0
    %374 = vmatpush1.msra.mxu0 0.0
    %375 = vmatprep.subr.mxu0 0.0
    %376 = vmatpush1.msra.mxu0 0.0
    %377 = vmatprep.subr.mxu0 0.0
    %378 = vmatpush1.msra.mxu0 0.0
    %379 = vmatprep.subr.mxu0 0.0
    %380 = vmatpush1.msra.mxu0 0.0
    %381 = vmatprep.subr.mxu0 0.0
    %382 = vmatpush1.msra.mxu0 0.0
    %383 = vmatprep.subr.mxu0 0.0
    %384 = vmatpush1.msra.mxu0 0.0
    %385 = vmatprep.subr.mxu0 0.0
    %386 = vmatpush1.msra.mxu0 0.0
    %387 = vmatprep.subr.mxu0 0.0
    %388 = vmatpush1.msra.mxu0 0.0
    %389 = vmatprep.subr.mxu0 0.0
    %390 = vmatpush1.msra.mxu0 0.0
    %391 = vmatprep.subr.mxu0 0.0
    %392 = vmatpush1.msra.mxu0 0.0
    %393 = vmatprep.subr.mxu0 0.0
    %394 = vmatpush1.msra.mxu0 0.0
    %395 = vmatprep.subr.mxu0 0.0
    %396 = vmatpush1.msra.mxu0 0.0
    %397 = vmatprep.subr.mxu0 0.0
    %398 = vmatpush1.msra.mxu0 0.0
    %399 = vmatprep.subr.mxu0 0.0
    %400 = vmatpush1.msra.mxu0 0.0
    %401 = vmatprep.subr.mxu0 0.0
    %402 = vmatpush1.msra.mxu0 0.0
    %403 = vmatprep.subr.mxu0 0.0
    %404 = vmatpush1.msra.mxu0 0.0
    %405 = vmatprep.subr.mxu0 0.0
    %406 = vmatpush1.msra.mxu0 0.0
    %407 = vmatprep.subr.mxu0 0.0
    %408 = vmatpush1.msra.mxu0 0.0
    %409 = vmatprep.subr.mxu0 0.0
    %410 = vmatpush1.msra.mxu0 0.0
    %411 = vmatprep.subr.mxu0 0.0
    %412 = vmatpush1.msra.mxu0 0.0
    %413 = vmatprep.subr.mxu0 0.0
    %414 = vmatpush1.msra.mxu0 0.0
    %415 = vmatprep.subr.mxu0 0.0
    %416 = vmatpush1.msra.mxu0 0.0
    %417 = vmatprep.subr.mxu0 0.0
    %418 = vmatpush1.msra.mxu0 0.0
    %419 = vmatprep.subr.mxu0 0.0
    %420 = vmatpush1.msra.mxu0 0.0
    %421 = vmatprep.subr.mxu0 0.0
    %422 = vmatpush1.msra.mxu0 0.0
    %423 = vmatprep.subr.mxu0 0.0
    %424 = vmatpush1.msra.mxu0 0.0
    %425 = vmatprep.subr.mxu0 0.0
    %426 = vmatpush1.msra.mxu0 0.0
    %427 = vmatprep.subr.mxu0 0.0
    %428 = vmatpush1.msra.mxu0 0.0
    %429 = vmatprep.mubr.f32.mxu0 0.0
    %v430 = vand.u32 %v56, 4294901760
    %431 = vmatmul.mubr.f32.gmra.mrb[0].mxu0 %v430
    %v432 = vpop.f32.mrb[0].mxu0
    %v433 = vadd.f32 %v359, %v432
    %v434 = vpop.f32.mrb[0].mxu0
    %435 = vdwg.mxu0
    %436 = vmatprep.subr.mxu0 0.0
    %v437 = vand.u32 %v60, 4294901760
    %438 = vmatpush1.msra.mxu0 %v437
    %439 = vmatprep.subr.mxu0 0.0
    %440 = vmatpush1.msra.mxu0 0.0
    %441 = vmatprep.subr.mxu0 0.0
    %442 = vmatpush1.msra.mxu0 0.0
    %443 = vmatprep.subr.mxu0 0.0
    %444 = vmatpush1.msra.mxu0 0.0
    %445 = vmatprep.subr.mxu0 0.0
    %446 = vmatpush1.msra.mxu0 0.0
    %447 = vmatprep.subr.mxu0 0.0
    %448 = vmatpush1.msra.mxu0 0.0
    %449 = vmatprep.subr.mxu0 0.0
    %450 = vmatpush1.msra.mxu0 0.0
    %451 = vmatprep.subr.mxu0 0.0
    %452 = vmatpush1.msra.mxu0 0.0
    %453 = vmatprep.subr.mxu0 0.0
    %454 = vmatpush1.msra.mxu0 0.0
    %455 = vmatprep.subr.mxu0 0.0
    %456 = vmatpush1.msra.mxu0 0.0
    %457 = vmatprep.subr.mxu0 0.0
    %458 = vmatpush1.msra.mxu0 0.0
    %459 = vmatprep.subr.mxu0 0.0
    %460 = vmatpush1.msra.mxu0 0.0
    %461 = vmatprep.subr.mxu0 0.0
    %462 = vmatpush1.msra.mxu0 0.0
    %463 = vmatprep.subr.mxu0 0.0
    %464 = vmatpush1.msra.mxu0 0.0
    %465 = vmatprep.subr.mxu0 0.0
    %466 = vmatpush1.msra.mxu0 0.0
    %467 = vmatprep.subr.mxu0 0.0
    %468 = vmatpush1.msra.mxu0 0.0
    %469 = vmatprep.subr.mxu0 0.0
    %470 = vmatpush1.msra.mxu0 0.0
    %471 = vmatprep.subr.mxu0 0.0
    %472 = vmatpush1.msra.mxu0 0.0
    %473 = vmatprep.subr.mxu0 0.0
    %474 = vmatpush1.msra.mxu0 0.0
    %475 = vmatprep.subr.mxu0 0.0
    %476 = vmatpush1.msra.mxu0 0.0
    %477 = vmatprep.subr.mxu0 0.0
    %478 = vmatpush1.msra.mxu0 0.0
    %479 = vmatprep.subr.mxu0 0.0
    %480 = vmatpush1.msra.mxu0 0.0
    %481 = vmatprep.subr.mxu0 0.0
    %482 = vmatpush1.msra.mxu0 0.0
    %483 = vmatprep.subr.mxu0 0.0
    %484 = vmatpush1.msra.mxu0 0.0
    %485 = vmatprep.subr.mxu0 0.0
    %486 = vmatpush1.msra.mxu0 0.0
    %487 = vmatprep.subr.mxu0 0.0
    %488 = vmatpush1.msra.mxu0 0.0
    %489 = vmatprep.subr.mxu0 0.0
    %490 = vmatpush1.msra.mxu0 0.0
    %491 = vmatprep.subr.mxu0 0.0
    %492 = vmatpush1.msra.mxu0 0.0
    %493 = vmatprep.subr.mxu0 0.0
    %494 = vmatpush1.msra.mxu0 0.0
    %495 = vmatprep.subr.mxu0 0.0
    %496 = vmatpush1.msra.mxu0 0.0
    %497 = vmatprep.subr.mxu0 0.0
    %498 = vmatpush1.msra.mxu0 0.0
    %499 = vmatprep.subr.mxu0 0.0
    %500 = vmatpush1.msra.mxu0 0.0
    %501 = vmatprep.mubr.f32.mxu0 0.0
    %v502 = vand.u32 %v56, 4294901760
    %503 = vmatmul.mubr.f32.gmra.mrb[0].mxu0 %v502
    %v504 = vpop.f32.mrb[0].mxu0
    %v505 = vadd.f32 %v433, %v504
    %v506 = vpop.f32.mrb[0].mxu0
    %507 = vdwg.mxu0
    %v508 = vld [vmem:[%s4] sm:$0x1]
    %vm509 = vcmp.gt.f32.partialorder %v508, 0.5
    %v510 = vand.u32 2147483647, %v505
    %vm511 = vcmp.le.f32.partialorder %v510, 0.7853982
    %vm512 = vcmp.lt.s32.totalorder %v505, 0
    %v513 = vand.u32 %v505, 2139095040
    %v514 = vshrl.u32 %v513, 23
    %v515 = vsub.s32 %v514, 127
    %v516 = vand.u32 2147483647, %v505
    %v517 = vand.u32 %v516, 8388607
    %v518 = vor.u32 %v517, 8388608
    %v519 = vsub.s32 0, %v518
    %v520 = vadd.s32 %v515, 1
    %vm521 = vcmp.gt.s32.totalorder %v520, 0
    %v522 = vsel %vm521, %v520, 0
    %v523 = vshrl.u32 %v522, 5
    %v524 = vand.u32 %v522, 31
    %v525 = vsub.s32 32, %v524
    %v526 = vshrl.u32 683565275, %v525
    %v527 = vshll.u32 683565275, %v524
    %v528 = vshrl.u32 2475754826, %v525
    %v529 = vor.u32 %v527, %v528
    %v530 = vshll.u32 2475754826, %v524
    %v531 = vshrl.u32 2131351028, %v525
    %v532 = vor.u32 %v530, %v531
    %v533 = vshll.u32 2131351028, %v524
    %v534 = vshrl.u32 2102212464, %v525
    %v535 = vor.u32 %v533, %v534
    %v536 = vshll.u32 2102212464, %v524
    %v537 = vshrl.u32 920167782, %v525
    %v538 = vor.u32 %v536, %v537
    %v539 = vshll.u32 920167782, %v524
    %v540 = vshrl.u32 1326507024, %v525
    %v541 = vor.u32 %v539, %v540
    %vm542 = vcmp.lt.s32.totalorder %v523, 1
    %vm543 = vcmp.lt.s32.totalorder %v523, 2
    %vm544 = vcmp.lt.s32.totalorder %v523, 3
    %vm545 = vcmp.lt.s32.totalorder %v523, 4
    %v546 = vsel %vm542, %v526, %v529
    %v547 = vsel %vm545, %v535, 2102212464
    %v548 = vsel %vm544, %v532, %v547
    %v549 = vsel %vm543, %v546, %v548
    %v550 = vsel %vm542, %v529, %v532
    %v551 = vsel %vm545, %v538, 920167782
    %v552 = vsel %vm544, %v535, %v551
    %v553 = vsel %vm543, %v550, %v552
    %v554 = vsel %vm542, %v532, %v535
    %v555 = vsel %vm545, %v541, 1326507024
    %v556 = vsel %vm544, %v538, %v555
    %v557 = vsel %vm543, %v554, %v556
    %v558 = vshll.u32 %v518, 8
    %v559 = vmul.u32.u64.compose %v558, %v557
    %v560 = vextract.low.u32 %v559
    %v561 = vextract.high.u32 %v559
    %v562 = vmul.u32.u64.compose %v558, %v553
    %v563 = vextract.low.u32 %v562
    %v564 = vextract.high.u32 %v562
    %v565 = vmul.u32 %v558, %v549
    %v566 = vadd.s32 %v561, %v563
    %vm567 = vc.u32 %v561, %v563
    %v568 = vadd.s32 %v564, 1
    %v569 = vsel %vm567, %v568, %v564
    %v570 = vadd.s32 %v565, %v569
    %v571 = vadd.s32 %v570, 536870912
    %v572 = vshrl.u32 %v571, 30
    %v573 = vshll.u32 %v572, 30
    %v574 = vsub.s32 %v570, %v573
    %vm575 = vcmp.lt.s32.totalorder %v574, 0
    %v576 = vsub.s32 0, %v574
    %v577 = vsel %vm575, %v576, %v574
    %v578 = vclz %v577
    %v579 = vsub.s32 %v578, 2
    %vm580 = vcmp.gt.s32.totalorder 0, %v579
    %v581 = vsel %vm580, 0, %v579
    %v582 = vsub.s32 32, %v581
    %v583 = vshll.u32 %v574, %v581
    %v584 = vshrl.u32 %v566, %v582
    %v585 = vor.u32 %v583, %v584
    %v586 = vsub.s32 4294967266, %v581
    %v587 = vadd.s32 %v586, 127
    %v588 = vshll.u32 %v587, 23
    %v589 = vor.u32 4788187, %v588
    %v590 = vand.u32 2147483647, %v589
    %v592 = vcvt.s32.f32 %v585
    %v593 = vmul.f32 %v592, %v590
    %v594 = vxor.u32 %v593, 2147483648
    %v595 = vsel %vm512, %v594, %v593
    %v596 = vsub.s32 4, %v572
    %v597 = vsel %vm512, %v596, %v572
    %v598 = vsel %vm511, %v505, %v595
    %v599 = vsel %vm511, 0, %v597
    %v600 = vcosq.f32.pop %v598
    %v601 = vsinq.f32.pop %v598
    %vm602 = vweird.f32 %v505
    %v603 = vadd.s32 %v599, 3
    %v604 = vand.u32 %v603, 3
    %vm605 = vcmp.lt.s32.totalorder %v604, 2
    %vm606 = vcmp.eq.s32.totalorder %v604, 0
    %v607 = vxor.u32 %v601, 2147483648
    %v608 = vsel %vm606, %v600, %v607
    %vm609 = vcmp.eq.s32.totalorder %v604, 2
    %v610 = vxor.u32 %v600, 2147483648
    %v611 = vsel %vm609, %v610, %v601
    %v612 = vsel %vm605, %v608, %v611
    %v613 = vsel %vm602, nan, %v612
    %v614 = vsel %vm509, 1, 0
    %v615 = vlaneseq
    %v616 = vshrl.u32 %v615, 7
    %v617 = vsub.s32 0, %v616
    %v618 = vrot.slane %v614, %v617
    %vm619 = vcmp.eq.s32.totalorder %v618, 1
    %v620 = vsel %vm619, %v505, %v613
    %v621 = vld [vmem:[#allocation2] sm:$0xf]
    %v622 = vadd.f32 %v621, %v620
    %623 = vst [vmem:[#allocation7] sm:$0xf] %v622
    // Predicated region
    $region30: #{tpu_custom_call.1} parent=1 // pred_check
      _
    $region31: #{tpu_custom_call.1} parent=1 // pred_check_branch
      %625 = sbr.rel (0) target = $region33
    $region32: #{tpu_custom_call.1} parent=1 // pred_region
      %s627 = ssub.s32 64, 64
      %628 = vsyncadd [#allocation4], %s627
      %s630 = sshll.u32 [#allocation7], 4
      %s631 = int_to_ptr.vmem [resolvable:$true] %s630
      %633 = dma.vmem_to_hbm [thread:$0]  %s631, 64, %s5, [#allocation4]
    $region33: #{tpu_custom_call.1} parent=1 // pred_fallthru
      _
    // Predicated region
    $region34: #{tpu_custom_call.1} parent=1 // pred_check
      _
    $region35: #{tpu_custom_call.1} parent=1 // pred_check_branch
      %635 = sbr.rel (0) target = $region37
    $region36: #{tpu_custom_call.1} parent=1 // pred_region
      %636 = dma.done [#allocation4], 64
    $region37: #{tpu_custom_call.1} parent=1 // pred_fallthru
      _
    %637 = vsyncpa [#allocation3], 1
    %638 = vsyncpa [#allocation6], 1
    %639 = vsyncpa [#allocation4], 1

</llo_original>
